<compile_context>
chip_gen: v6e
topology: v6e:2x2x1
jax: 0.10.0
libtpu: 0.0.40
codegen_flags: <defaults>
</compile_context>

<pallas_src>
import jax
import jax.numpy as jnp
from jax.experimental import pallas as pl
from jax.experimental.pallas import tpu as pltpu


def _spatial_gating_kernel(w_ref, b_ref, x_ref, o_ref):
    # w_ref: (C, 1)  conv weight in VMEM
    # b_ref: (1,)    conv bias in SMEM (scalar read)
    # x_ref: (Bt, C, T) tile of the input; o_ref: same shape/dtype
    x = x_ref[...]                                              # (Bt, C, T)
    w = w_ref[...].astype(jnp.float32)                          # (C, 1)
    # 1x1 conv == per-pixel reduction over C: VPU multiply + sublane reduce.
    # (No MXU: a (1,C)@(C,T) matmul would use 1 row of the systolic array and
    #  serialize through the result FIFO — pure wasted latency here.)
    logits = jnp.sum(x.astype(jnp.float32) * w[None, :, :], axis=1, keepdims=True)
    logits = logits + b_ref[0]                                  # (Bt, 1, T)
    gate = jax.nn.sigmoid(logits)                               # EUP, f32
    # Gating multiply + store in the input dtype.
    o_ref[...] = (x * gate.astype(x.dtype)).astype(o_ref.dtype)


def _choose_tiles(B, C, HW, itemsize,
                  lane_tile_cap=2048,          # f32-lane sweet spot (512–2048)
                  target_block_bytes=1 << 20,  # ~1 MiB per block
                  max_block_bytes=2 << 20):    # hard cap; x4 buffers stays << VMEM
    """Pick (batch_tile Bt, lane_tile T) for the (Bt, C, T) block."""
    bytes_per_row = max(1, C * itemsize)
    # Lane tile: multiple of 128, capped by the per-block VMEM budget.
    max_t_by_vmem = max(128, (max_block_bytes // bytes_per_row) // 128 * 128)
    lane_cap = min(lane_tile_cap, max_t_by_vmem)
    # Full-HW blocks are always legal; otherwise tile (cdiv grid masks the tail).
    T = HW if HW <= lane_cap else lane_cap
    # Batch tile: amortize the ~0.35 us per-grid-step overhead (matters when C
    # is small and a single (C, T) slab is only a few KiB).
    per_batch_bytes = max(1, C * T * itemsize)
    Bt = int(min(B, max(1, target_block_bytes // per_batch_bytes)))
    return Bt, T


def spatial_gating(x_nchw, weight, bias):
    """x_nchw: (B, C, H, W); weight: (1, C, 1, 1); bias: (1,)."""
    B, C, H, W = x_nchw.shape
    HW = H * W
    itemsize = jnp.dtype(x_nchw.dtype).itemsize

    x_flat = x_nchw.reshape(B, C, HW)
    w2d = weight.reshape(C, 1)
    b1d = bias.reshape(1)

    Bt, T = _choose_tiles(B, C, HW, itemsize)
    grid = (pl.cdiv(B, Bt), pl.cdiv(HW, T))

    out_flat = pl.pallas_call(
        _spatial_gating_kernel,
        out_shape=jax.ShapeDtypeStruct((B, C, HW), x_nchw.dtype),
        grid=grid,
        in_specs=[
            pl.BlockSpec((C, 1), lambda bi, ti: (0, 0)),                 # weight (VMEM)
            pl.BlockSpec(memory_space=pltpu.MemorySpace.SMEM),           # bias (SMEM scalar)
            pl.BlockSpec((Bt, C, T), lambda bi, ti: (bi, 0, ti)),        # x tile
        ],
        out_specs=pl.BlockSpec((Bt, C, T), lambda bi, ti: (bi, 0, ti)),
        compiler_params=pltpu.CompilerParams(
            dimension_semantics=("parallel", "parallel")),
        cost_estimate=pl.CostEstimate(
            flops=3 * B * C * HW,
            transcendentals=B * HW,
            bytes_accessed=2 * B * C * HW * itemsize),
    )(w2d, b1d, x_flat)

    return out_flat.reshape(B, C, H, W)


if __name__ == "__main__":
    B, C, H, W = 2, 4, 16, 16

    key = jax.random.PRNGKey(0)
    kx, kw, kb = jax.random.split(key, 3)

    x = jax.random.normal(kx, (B, C, H, W), dtype=jnp.float32)
    # Deterministic parameter init (Conv2d(C, 1, kernel_size=1) shapes).
    weight = jax.random.normal(kw, (1, C, 1, 1), dtype=jnp.float32) * 0.5
    bias = jax.random.normal(kb, (1,), dtype=jnp.float32) * 0.1

    out = spatial_gating(x, weight, bias)
    out = jax.block_until_ready(out)

    # Pure-JAX reference check of the same semantics.
    gate_ref = jax.nn.sigmoid(
        jnp.einsum("bchw,c->bhw", x, weight.reshape(C)) + bias[0]
    )[:, None, :, :]
    ref = x * gate_ref
    assert jnp.allclose(out, ref, atol=1e-5, rtol=1e-5), "mismatch vs reference"

    print("KERNEL_OK")
</pallas_src>

<mosaic_0001>
module attributes {stable_mosaic.version = 11 : i64} {
  func.func @_spatial_gating_kernel(%arg0: i32, %arg1: i32, %arg2: memref<4x1xf32, #tpu.memory_space<vmem>>, %arg3: memref<1xf32, #tpu.memory_space<smem>>, %arg4: memref<2x4x256xf32, #tpu.memory_space<vmem>>, %arg5: memref<2x4x256xf32, #tpu.memory_space<vmem>>) attributes {dimension_semantics = [#tpu.dimension_semantics<parallel>, #tpu.dimension_semantics<parallel>], iteration_bounds = array<i64: 1, 1>, scalar_prefetch = 0 : i64, scratch_operands = 0 : i64, tpu.core_type = #tpu.core_type<tc>, window_params = [{pipeline_mode = #tpu.pipeline_mode<synchronous>, transform_indices = @transform_0, window_bounds = array<i64: 4, 1>}, {transform_indices = @transform_1, window_bounds = array<i64: 1>}, {transform_indices = @transform_2, window_bounds = array<i64: 2, 4, 256>}, {transform_indices = @transform_3, window_bounds = array<i64: 2, 4, 256>}]} {
    %c0 = arith.constant 0 : index
    %c0_0 = arith.constant 0 : index
    %c0_1 = arith.constant 0 : index
    %0 = vector.load %arg4[%c0, %c0_0, %c0_1] : memref<2x4x256xf32, #tpu.memory_space<vmem>>, vector<2x4x256xf32>
    %c0_2 = arith.constant 0 : index
    %c0_3 = arith.constant 0 : index
    %1 = vector.load %arg2[%c0_2, %c0_3] : memref<4x1xf32, #tpu.memory_space<vmem>>, vector<4x1xf32>
    %2 = vector.shape_cast %1 : vector<4x1xf32> to vector<1x4x1xf32>
    %3 = vector.broadcast %2 : vector<1x4x1xf32> to vector<2x4x256xf32>
    %4 = arith.mulf %0, %3 : vector<2x4x256xf32>
    %cst = arith.constant dense<0.000000e+00> : vector<2x256xf32>
    %5 = vector.multi_reduction <add>, %4, %cst [1] : vector<2x4x256xf32> to vector<2x256xf32>
    %6 = vector.shape_cast %5 : vector<2x256xf32> to vector<2x1x256xf32>
    %c0_4 = arith.constant 0 : index
    %7 = memref.load %arg3[%c0_4] : memref<1xf32, #tpu.memory_space<smem>>
    %8 = vector.broadcast %7 : f32 to vector<2x1x256xf32>
    %9 = arith.addf %6, %8 : vector<2x1x256xf32>
    %10 = arith.negf %9 : vector<2x1x256xf32>
    %11 = math.exp %10 : vector<2x1x256xf32>
    %cst_5 = arith.constant 1.000000e+00 : f32
    %12 = vector.broadcast %cst_5 : f32 to vector<2x1x256xf32>
    %13 = arith.addf %12, %11 : vector<2x1x256xf32>
    %14 = arith.divf %12, %13 : vector<2x1x256xf32>
    %15 = vector.broadcast %14 : vector<2x1x256xf32> to vector<2x4x256xf32>
    %16 = arith.mulf %0, %15 : vector<2x4x256xf32>
    %c0_6 = arith.constant 0 : index
    %c0_7 = arith.constant 0 : index
    %c0_8 = arith.constant 0 : index
    %17 = vector.load %arg5[%c0_6, %c0_7, %c0_8] : memref<2x4x256xf32, #tpu.memory_space<vmem>>, vector<2x4x256xf32>
    tpu.vector_store %arg5[%c0_6, %c0_7, %c0_8], %16 {strides = array<i32>} : memref<2x4x256xf32, #tpu.memory_space<vmem>>, vector<2x4x256xf32>,
    return
  }
  func.func @transform_0(%arg0: i32, %arg1: i32) -> (i32, i32) {
    %c0_i32 = arith.constant 0 : i32
    %c0_i32_0 = arith.constant 0 : i32
    %c0_i32_1 = arith.constant 0 : i32
    return %c0_i32, %c0_i32_0 : i32, i32
  }
  func.func @transform_1(%arg0: i32, %arg1: i32) -> i32 {
    %c0_i32 = arith.constant 0 : i32
    %c0_i32_0 = arith.constant 0 : i32
    return %c0_i32 : i32
  }
  func.func @transform_2(%arg0: i32, %arg1: i32) -> (i32, i32, i32) {
    %c0_i32 = arith.constant 0 : i32
    %c0_i32_0 = arith.constant 0 : i32
    return %arg0, %c0_i32, %arg1 : i32, i32, i32
  }
  func.func @transform_3(%arg0: i32, %arg1: i32) -> (i32, i32, i32) {
    %c0_i32 = arith.constant 0 : i32
    %c0_i32_0 = arith.constant 0 : i32
    return %arg0, %c0_i32, %arg1 : i32, i32, i32
  }
}

</mosaic_0001>

<llo_original>
// kernel: tpu_custom_call.1
$region0: #{tpu_custom_call.1}
  #allocation0 [shape = 'u32[]', space=smem, size = 0x4, offset = 0x4, fixed_abs, tag = 'smem constant byte address 0x4 - core index']
  #allocation1 [shape = 'u32[144,128]{1,0:T(1,128)}', space=vmem, size = 0x12000, scoped, tag = 'internal scratch']
  #allocation2 [shape = 'f32[1]{0:T(128)S(6)}', space=smem, size = 0x200, scoped, tag = 'scoped memory for tpu_custom_call.1']
  %s0 = inlined_call_operand.vmem [shape: f32[4,1], index: 0, kind: input, shape index: {}]
  %s1 = inlined_call_operand.<no memory space> [shape: f32[1], index: 1, kind: input, shape index: {}]
  %s2 = inlined_call_operand.hbm [shape: f32[2,4,256], index: 2, kind: input, shape index: {}]
  %s3 = inlined_call_operand.hbm [shape: f32[2,4,256], index: 3, kind: output, shape index: {}]
  %s4 = sld [smem:[#allocation0]]
  $region26: #{tpu_custom_call.1} parent=0
    _
  %s6 = ssub.s32 1, %s4
  %s7 = scalar_select 0, %s6, %s4
  %8 = sst [smem:[#allocation2]] %s1
  $region1: #{tpu_custom_call.1} parent=0
    #allocation3 [shape = 'u8[8192]{0}', space=vmem, size = 0x2000, scoped, tag = 'input window, operand 2, single buffered']
    #allocation4 [shape = 's32[1]{0}', space=sflag, size = 0x4, scoped, tag = 'scoped memory for tpu_custom_call.1']
    #allocation5 [shape = 's32[1]{0}', space=sflag, size = 0x4, scoped, tag = 'scoped memory for tpu_custom_call.1']
    #allocation6 [shape = 'u8[8192]{0}', space=vmem, size = 0x2000, scoped, tag = 'output window, operand 0, single buffered']
    %9 = vsyncpa [#allocation4], 0
    %10 = vsyncpa [#allocation5], 0
    // Predicated region
    $region2: #{tpu_custom_call.1} parent=1 // pred_check
      _
    $region3: #{tpu_custom_call.1} parent=1 // pred_check_branch
      %12 = sbr.rel (0) target = $region5
    $region4: #{tpu_custom_call.1} parent=1 // pred_region
      _
    $region5: #{tpu_custom_call.1} parent=1 // pred_fallthru
      _
    // Predicated region
    $region6: #{tpu_custom_call.1} parent=1 // pred_check
      _
    $region7: #{tpu_custom_call.1} parent=1 // pred_check_branch
      %14 = sbr.rel (0) target = $region9
    $region8: #{tpu_custom_call.1} parent=1 // pred_region
      _
    $region9: #{tpu_custom_call.1} parent=1 // pred_fallthru
      _
    // Predicated region
    $region10: #{tpu_custom_call.1} parent=1 // pred_check
      _
    $region11: #{tpu_custom_call.1} parent=1 // pred_check_branch
      %16 = sbr.rel (0) target = $region13
    $region12: #{tpu_custom_call.1} parent=1 // pred_region
      %s18 = ssub.s32 256, 256
      %19 = vsyncadd [#allocation4], %s18
      %s20 = sshll.u32 [#allocation3], 4
      %s21 = int_to_ptr.vmem [resolvable:$true] %s20
      %26 = dma.hbm_to_vmem [thread:$0]  %s2, 256, %s21, [#allocation4], 128, 128, 8
    $region13: #{tpu_custom_call.1} parent=1 // pred_fallthru
      _
    // Predicated region
    $region14: #{tpu_custom_call.1} parent=1 // pred_check
      _
    $region15: #{tpu_custom_call.1} parent=1 // pred_check_branch
      %28 = sbr.rel (0) target = $region17
    $region16: #{tpu_custom_call.1} parent=1 // pred_region
      %29 = dma.done [#allocation4], 256
    $region17: #{tpu_custom_call.1} parent=1 // pred_fallthru
      _
    %v30 = vld [vmem:[#allocation3] sm:$0xff]
    %v31 = vld [vmem:[#allocation3 + $0x8] sm:$0xff]
    %v32 = vld [vmem:[%s0] sm:$0xf]
    %34 = vset.pattern.permute.xlu0 0
    %35 = vperm.xlu0 %34, %v32
    %v36 = vpop.permute.xlu0 %35
    %v38 = vunpack.c.l.s4 839922192
    %v39 = vunpack.c.0.s8 %v38
    %v40 = vlaneseq
    %v41 = vshrl.u32 %v40, 7
    %v42 = vsub.s32 %v39, %v41
    %v43 = vrot.slane %v36, %v42
    %v45 = vmul.f32 %v30, %v43
    %v46 = vmul.f32 %v31, %v43
    %v49 = vcombine.high %v45, %v45
    %v50 = vcombine.high %v46, %v46
    %vm53 = vcmask 1043456
    %v54 = vsel %vm53, %v45, 0.0
    %v55 = vrot.slane %v54, 4
    %v56 = vadd.f32 %v54, %v55
    %v57 = vrot.slane %v56, 2
    %v58 = vadd.f32 %v56, %v57
    %v59 = vrot.slane %v58, 1
    %v60 = vadd.f32 %v58, %v59
    %v61 = vsel %vm53, %v49, 0.0
    %v62 = vrot.slane %v61, 4
    %v63 = vadd.f32 %v61, %v62
    %v64 = vrot.slane %v63, 2
    %v65 = vadd.f32 %v63, %v64
    %v66 = vrot.slane %v65, 1
    %v67 = vadd.f32 %v65, %v66
    %v68 = vsel %vm53, %v46, 0.0
    %v69 = vrot.slane %v68, 4
    %v70 = vadd.f32 %v68, %v69
    %v71 = vrot.slane %v70, 2
    %v72 = vadd.f32 %v70, %v71
    %v73 = vrot.slane %v72, 1
    %v74 = vadd.f32 %v72, %v73
    %v75 = vsel %vm53, %v50, 0.0
    %v76 = vrot.slane %v75, 4
    %v77 = vadd.f32 %v75, %v76
    %v78 = vrot.slane %v77, 2
    %v79 = vadd.f32 %v77, %v78
    %v80 = vrot.slane %v79, 1
    %v81 = vadd.f32 %v79, %v80
    %s82 = sld [smem:[#allocation2]]
    %v83 = vstv %s82
    %v84 = vadd.f32 %v60, %v83
    %v85 = vadd.f32 %v67, %v83
    %v86 = vadd.f32 %v74, %v83
    %v87 = vadd.f32 %v81, %v83
    %v88 = vxor.u32 %v84, 2147483648
    %v89 = vxor.u32 %v85, 2147483648
    %v90 = vxor.u32 %v86, 2147483648
    %v91 = vxor.u32 %v87, 2147483648
    %v92 = vmul.f32 %v88, 1.442695
    %v93 = vpow.pop %v92
    %v94 = vmul.f32 %v89, 1.442695
    %v95 = vpow.pop %v94
    %v96 = vmul.f32 %v90, 1.442695
    %v97 = vpow.pop %v96
    %v98 = vmul.f32 %v91, 1.442695
    %v99 = vpow.pop %v98
    %v100 = vadd.f32 %v93, 1.0
    %v101 = vadd.f32 %v95, 1.0
    %v102 = vadd.f32 %v97, 1.0
    %v103 = vadd.f32 %v99, 1.0
    %v104 = vrcp.pop %v100
    %v105 = vmul.f32 1.0, %v104
    %v106 = vrcp.pop %v101
    %v107 = vmul.f32 1.0, %v106
    %v108 = vrcp.pop %v102
    %v109 = vmul.f32 1.0, %v108
    %v110 = vrcp.pop %v103
    %v111 = vmul.f32 1.0, %v110
    %v116 = vcombine.low %v105, %v107
    %v117 = vcombine.low %v109, %v111
    %v120 = vmul.f32 %v30, %v116
    %v121 = vmul.f32 %v31, %v117
    %122 = vst [vmem:[#allocation6] sm:$0xff] %v120
    %123 = vst [vmem:[#allocation6 + $0x8] sm:$0xff] %v121
    // Predicated region
    $region18: #{tpu_custom_call.1} parent=1 // pred_check
      _
    $region19: #{tpu_custom_call.1} parent=1 // pred_check_branch
      %125 = sbr.rel (0) target = $region21
    $region20: #{tpu_custom_call.1} parent=1 // pred_region
      %s127 = ssub.s32 256, 256
      %128 = vsyncadd [#allocation5], %s127
      %s129 = sshll.u32 [#allocation6], 4
      %s130 = int_to_ptr.vmem [resolvable:$true] %s129
      %135 = dma.vmem_to_hbm [thread:$0]  %s130, 256, %s3, [#allocation5], 128, 128, 8
    $region21: #{tpu_custom_call.1} parent=1 // pred_fallthru
      _
    // Predicated region
    $region22: #{tpu_custom_call.1} parent=1 // pred_check
      _
    $region23: #{tpu_custom_call.1} parent=1 // pred_check_branch
      %137 = sbr.rel (0) target = $region25
    $region24: #{tpu_custom_call.1} parent=1 // pred_region
      %138 = dma.done [#allocation5], 256
    $region25: #{tpu_custom_call.1} parent=1 // pred_fallthru
      _
    %139 = vsyncpa [#allocation4], 1
    %140 = vsyncpa [#allocation5], 1

</llo_original>
